<compile_context>
chip_gen: v6e
topology: v6e:2x2x1
jax: 0.10.0
libtpu: 0.0.40
codegen_flags: <defaults>
</compile_context>

<pallas_src>
import jax
import jax.numpy as jnp
from jax.experimental import pallas as pl
from jax.experimental.pallas import tpu as pltpu


def _round_up(x, m):
    return ((x + m - 1) // m) * m


def _pick_tm(bq, cap=512):
    """Point-tile size: lane/sublane friendly, and >= ~8 grid steps for large
    problems so the pipeline overlaps and v7x's two TensorCores each get >=4
    steps.  512-wide tiles already sit near the measured roofline."""
    if bq <= 512:
        return max(8, _round_up(bq, 8))
    return max(256, min(cap, _round_up(-(-bq // 8), 256)))


# ----------------------------------------------------------------------------
# Pallas kernels
# ----------------------------------------------------------------------------
def matmul_bias_kernel(x_ref, w_ref, b_ref, o_ref):
    """o = x @ w + b   (used for the 3x3 encoder conv via im2col)."""
    acc = jnp.dot(x_ref[...], w_ref[...], preferred_element_type=jnp.float32)
    o_ref[...] = (acc + b_ref[...]).astype(o_ref.dtype)


def liif_query_kernel(x_ref, w1_ref, b1_ref, w2_ref, b2_ref, w3_ref, b3_ref,
                      o_ref):
    """LIIF query_rgb hot path for one tile of query points.

    x_ref : (4, TM, Ds) bf16 -- the 4 local-ensemble shifts stacked.  Lanes
            [0, D) are the MLP input (feat_unfold + rel_coord + rel_cell);
            lane D (the last lane, Ds = D+1) stashes that shift's precomputed
            diagonally-swapped, normalized ensemble weight.
    w1_ref: (Ds, Hd) bf16 with a zero row at the stash lane, so the layer-1
            contraction over Ds ignores the stashed weight.
    The 4 shifts are fused into a single (4*TM, Ds) matmul per MLP layer; the
    hidden path is bf16 with f32 MXU accumulation.  Output is bf16, lane-
    padded to 128 so stores stay unmasked.
    """
    four, tm, ds = x_ref.shape
    d = ds - 1
    xv = x_ref[...]                                        # (4, TM, Ds) bf16
    x = xv.reshape(four * tm, ds)                          # free relayout
    h = jnp.dot(x, w1_ref[...], preferred_element_type=jnp.float32) + b1_ref[...]
    h = jnp.maximum(h, 0.0).astype(jnp.bfloat16)
    h = jnp.dot(h, w2_ref[...], preferred_element_type=jnp.float32) + b2_ref[...]
    h = jnp.maximum(h, 0.0).astype(jnp.bfloat16)
    p = jnp.dot(h, w3_ref[...], preferred_element_type=jnp.float32) + b3_ref[...]
    p = p.reshape(four, tm, p.shape[-1])                   # (4, TM, Np) f32
    e = xv[:, :, d:].astype(jnp.float32)                   # (4, TM, 1) ensemble
    o_ref[...] = jnp.sum(p * e, axis=0).astype(o_ref.dtype)


# ----------------------------------------------------------------------------
# Pallas wrappers
# ----------------------------------------------------------------------------
def pallas_matmul_bias(x, w, b, tm=512, out_dtype=jnp.float32):
    """x @ w + b with M-tiling.  Operands cast to bf16 (f32 accumulation);
    K padded to a sublane multiple; the output keeps only N lanes in HBM."""
    M, K = x.shape
    Kw, N = w.shape
    assert Kw == K
    Kp = _round_up(K, 8)
    Mt = min(tm, _round_up(M, 8))
    Mp = _round_up(M, Mt)

    xp = jnp.pad(x, ((0, Mp - M), (0, Kp - K))).astype(jnp.bfloat16)
    wp = jnp.pad(w, ((0, Kp - K), (0, 0))).astype(jnp.bfloat16)
    bp = b.reshape(1, N).astype(jnp.float32)

    out = pl.pallas_call(
        matmul_bias_kernel,
        out_shape=jax.ShapeDtypeStruct((Mp, N), out_dtype),
        grid=(Mp // Mt,),
        in_specs=[
            pl.BlockSpec((Mt, Kp), lambda i: (i, 0)),
            pl.BlockSpec((Kp, N), lambda i: (0, 0)),
            pl.BlockSpec((1, N), lambda i: (0, 0)),
        ],
        out_specs=pl.BlockSpec((Mt, N), lambda i: (i, 0)),
        compiler_params=pltpu.CompilerParams(
            dimension_semantics=("parallel",),
            vmem_limit_bytes=32 * 1024 * 1024),
    )(xp, wp, bp)
    return out[:M]


def pallas_liif_query(x_all, imnet_params, D, tm):
    """x_all: (4, BQp, Ds) bf16 stacked MLP inputs (stash lane = ensemble
    weight), already row-padded to a multiple of tm.  Returns (BQp, Od) bf16."""
    four, BQp, Ds = x_all.shape
    assert BQp % tm == 0
    w1, b1, w2, b2, w3, b3 = imnet_params
    Hd = w1.shape[1]
    Od = w3.shape[1]
    Np = _round_up(Od, 128)

    # Weight prep: zero row(s) at the stash lane(s) so the layer-1 contraction
    # over Ds ignores them; all weights in bf16 (f32 MXU accumulation), biases
    # stay f32 (added to the f32 accumulator).
    w1p = jnp.pad(w1, ((0, Ds - D), (0, 0))).astype(x_all.dtype)
    b1p = b1.reshape(1, Hd).astype(jnp.float32)
    w2p = w2.astype(jnp.bfloat16)
    b2p = b2.reshape(1, Hd).astype(jnp.float32)
    w3p = jnp.pad(w3, ((0, 0), (0, Np - Od))).astype(jnp.bfloat16)
    b3p = jnp.pad(b3.astype(jnp.float32), ((0, Np - Od),)).reshape(1, Np)

    out = pl.pallas_call(
        liif_query_kernel,
        out_shape=jax.ShapeDtypeStruct((BQp, Np), jnp.bfloat16),
        grid=(BQp // tm,),
        in_specs=[
            pl.BlockSpec((4, tm, Ds), lambda i: (0, i, 0)),
            pl.BlockSpec((Ds, Hd), lambda i: (0, 0)),
            pl.BlockSpec((1, Hd), lambda i: (0, 0)),
            pl.BlockSpec((Hd, Hd), lambda i: (0, 0)),
            pl.BlockSpec((1, Hd), lambda i: (0, 0)),
            pl.BlockSpec((Hd, Np), lambda i: (0, 0)),
            pl.BlockSpec((1, Np), lambda i: (0, 0)),
        ],
        out_specs=pl.BlockSpec((tm, Np), lambda i: (i, 0)),
        compiler_params=pltpu.CompilerParams(
            dimension_semantics=("parallel",),
            vmem_limit_bytes=32 * 1024 * 1024),
    )(x_all, w1p, b1p, w2p, b2p, w3p, b3p)
    return out[:, :Od]


# ----------------------------------------------------------------------------
# Plain-JAX glue (reshapes, im2col, nearest-neighbor gather, coordinate math)
# ----------------------------------------------------------------------------
def unfold3x3(x_nchw):
    """F.unfold(x, (3,3), padding=1).view(B, C*9, H, W) -- channel order
    c*9 + kh*3 + kw, matching PyTorch."""
    B, C, H, W = x_nchw.shape
    xp = jnp.pad(x_nchw, ((0, 0), (0, 0), (1, 1), (1, 1)))
    patches = [xp[:, :, kh:kh + H, kw:kw + W] for kh in range(3) for kw in range(3)]
    return jnp.stack(patches, axis=2).reshape(B, C * 9, H, W)


def encoder_forward(inp_nchw, w_conv, b_conv, tm=512):
    """3x3 conv, padding=1, via im2col + Pallas matmul (bf16 operands)."""
    B, Cin, H, W = inp_nchw.shape
    Cf = w_conv.shape[0]
    patches = unfold3x3(inp_nchw)                                  # (B, Cin*9, H, W)
    cols = patches.transpose(0, 2, 3, 1).reshape(B * H * W, Cin * 9)
    w_mat = w_conv.reshape(Cf, Cin * 9).T                          # (Cin*9, Cf)
    out = pallas_matmul_bias(cols, w_mat, b_conv, tm=tm)           # (B*H*W, Cf)
    return out.reshape(B, H, W, Cf).transpose(0, 3, 1, 2)          # NCHW


def build_query_inputs(feat_nchw, coord, cell, row_pad_to, x_dtype=jnp.bfloat16):
    """Builds the (4, BQp, D+1) stacked imnet inputs (feat_unfold + local
    ensemble + cell_decode), replicating LIIF's query_rgb preprocessing.  The
    last lane of each shift stashes its diagonally-swapped, normalized
    ensemble weight.  Rows are padded to a multiple of `row_pad_to` and the
    array is produced directly in `x_dtype` (single materialization)."""
    B, Cf, H, W = feat_nchw.shape
    Q = coord.shape[1]
    BQ = B * Q
    feat_unf = unfold3x3(feat_nchw)                                # (B, Cf*9, H, W)
    C9 = Cf * 9
    feat_hwc = feat_unf.transpose(0, 2, 3, 1)                      # (B, H, W, C9)

    rx = 2.0 / H / 2.0
    ry = 2.0 / W / 2.0
    eps = 1e-6
    b_idx = jnp.arange(B)[:, None]

    shift_feats, rels, areas = [], [], []
    for vx in (-1, 1):
        for vy in (-1, 1):
            cshift = coord.at[..., 0].add(vx * rx + eps)
            cshift = cshift.at[..., 1].add(vy * ry + eps)
            cshift = jnp.clip(cshift, -1 + 1e-6, 1 - 1e-6)
            # grid_sample(mode='nearest', align_corners=False):
            # idx = floor((c+1)/2 * size)  (differs from torch only exactly on
            # half-integer cell boundaries, which the eps shift avoids)
            ix = jnp.clip(jnp.floor((cshift[..., 0] + 1.0) * 0.5 * H), 0, H - 1).astype(jnp.int32)
            iy = jnp.clip(jnp.floor((cshift[..., 1] + 1.0) * 0.5 * W), 0, W - 1).astype(jnp.int32)
            q_feat = feat_hwc[b_idx, ix, iy]                       # (B, Q, C9)
            # make_coord pixel centers at the gathered indices
            qc_x = -1.0 + (2.0 * ix.astype(jnp.float32) + 1.0) / H
            qc_y = -1.0 + (2.0 * iy.astype(jnp.float32) + 1.0) / W
            rel_x = (coord[..., 0] - qc_x) * H
            rel_y = (coord[..., 1] - qc_y) * W
            shift_feats.append(q_feat)
            rels.append((rel_x, rel_y))
            areas.append(jnp.abs(rel_x * rel_y) + 1e-9)            # (B, Q)

    tot = areas[0] + areas[1] + areas[2] + areas[3]
    # LIIF swaps diagonally-opposite areas before weighting: pred s gets area[3-s].
    ens = [areas[3 - s] / tot for s in range(4)]                   # (B, Q) each

    rel_cell = cell * jnp.array([H, W], dtype=jnp.float32)         # (B, Q, 2)
    D = C9 + 4
    Ds = D + 1                                                     # + stash lane

    xs = []
    for s in range(4):
        rel_x, rel_y = rels[s]
        xs.append(jnp.concatenate(
            [shift_feats[s], rel_x[..., None], rel_y[..., None], rel_cell,
             ens[s][..., None]], axis=-1).astype(x_dtype))         # (B, Q, Ds)
    x_all = jnp.stack(xs, axis=0).reshape(4, BQ, Ds)

    BQp = _round_up(BQ, row_pad_to)
    if BQp != BQ:
        x_all = jnp.pad(x_all, ((0, 0), (0, BQp - BQ), (0, 0)))
    return x_all, D


def liif_forward(params, inp, coord, cell):
    """Full LIIF forward: gen_feat (encoder) + query_rgb."""
    feat = encoder_forward(inp, params["w_conv"], params["b_conv"])
    B, Q = coord.shape[:2]
    BQ = B * Q
    tm = _pick_tm(BQ)
    x_all, D = build_query_inputs(feat, coord, cell, row_pad_to=tm)
    imnet_params = (params["w1"], params["b1"], params["w2"], params["b2"],
                    params["w3"], params["b3"])
    out = pallas_liif_query(x_all, imnet_params, D, tm)            # (BQp, Od) bf16
    return out[:BQ].astype(jnp.float32).reshape(B, Q, -1)


# ----------------------------------------------------------------------------
# Pure-JAX references (for correctness checking of the Pallas hot path)
# ----------------------------------------------------------------------------
def ref_query_matched(x_all_bf16, params, D):
    """Matches kernel numerics: bf16 x / weights / hidden activations /
    stashed ensemble weights, f32 accumulation, bf16 output rounding."""
    hp = jax.lax.Precision.HIGHEST
    f32 = jnp.float32
    x = x_all_bf16[..., :D].astype(f32)
    e = x_all_bf16[..., D:].astype(f32)                            # (4, BQ, 1)
    w1 = params["w1"].astype(jnp.bfloat16).astype(f32)
    w2 = params["w2"].astype(jnp.bfloat16).astype(f32)
    w3 = params["w3"].astype(jnp.bfloat16).astype(f32)
    ret = 0.0
    for s in range(4):
        h = jnp.maximum(jnp.dot(x[s], w1, precision=hp) + params["b1"], 0.0)
        h = h.astype(jnp.bfloat16).astype(f32)
        h = jnp.maximum(jnp.dot(h, w2, precision=hp) + params["b2"], 0.0)
        h = h.astype(jnp.bfloat16).astype(f32)
        p = jnp.dot(h, w3, precision=hp) + params["b3"]
        ret = ret + p * e[s]
    return ret.astype(jnp.bfloat16).astype(f32)


def ref_query_f32(feat, coord, cell, params):
    """Full-precision semantic reference for query_rgb."""
    x_all, D = build_query_inputs(feat, coord, cell, row_pad_to=1,
                                  x_dtype=jnp.float32)
    hp = jax.lax.Precision.HIGHEST
    x = x_all[..., :D]
    e = x_all[..., D:]                                             # (4, BQ, 1)
    ret = 0.0
    for s in range(4):
        h = jnp.maximum(jnp.dot(x[s], params["w1"], precision=hp) + params["b1"], 0.0)
        h = jnp.maximum(jnp.dot(h, params["w2"], precision=hp) + params["b2"], 0.0)
        ret = ret + (jnp.dot(h, params["w3"], precision=hp) + params["b3"]) * e[s]
    return ret


# ----------------------------------------------------------------------------
# Main
# ----------------------------------------------------------------------------
if __name__ == "__main__":
    B, Cin, H, W = 2, 3, 16, 16
    Cf = 8                      # encoder out_dim
    Hd = 32                     # imnet hidden width
    Od = 3                      # imnet out_dim (RGB)
    Q = 512                     # queries per image -> B*Q = 1024 (4 tiles of 256)
    D = Cf * 9 + 2 + 2          # feat_unfold*9 + rel_coord + rel_cell

    key = jax.random.PRNGKey(0)
    kcw, kcb, k1, k2, k3, kin, kco = jax.random.split(key, 7)

    params = {
        "w_conv": 0.1 * jax.random.normal(kcw, (Cf, Cin, 3, 3), jnp.float32),
        "b_conv": 0.01 * jax.random.normal(kcb, (Cf,), jnp.float32),
        "w1": 0.1 * jax.random.normal(k1, (D, Hd), jnp.float32),
        "b1": jnp.zeros((Hd,), jnp.float32),
        "w2": 0.1 * jax.random.normal(k2, (Hd, Hd), jnp.float32),
        "b2": jnp.zeros((Hd,), jnp.float32),
        "w3": 0.1 * jax.random.normal(k3, (Hd, Od), jnp.float32),
        "b3": jnp.zeros((Od,), jnp.float32),
    }

    inp = jax.random.normal(kin, (B, Cin, H, W), jnp.float32)
    coord = jax.random.uniform(kco, (B, Q, 2), jnp.float32, minval=-1.0, maxval=1.0)
    # cell sizes as if rendering a 32x32 target
    cell = jnp.broadcast_to(jnp.array([2.0 / 32, 2.0 / 32], jnp.float32), (B, Q, 2))

    out = jax.block_until_ready(liif_forward(params, inp, coord, cell))
    assert out.shape == (B, Q, Od), out.shape

    # correctness check of the Pallas query kernel vs. pure-JAX references
    feat = encoder_forward(inp, params["w_conv"], params["b_conv"])
    tm = _pick_tm(B * Q)
    x_all, Dact = build_query_inputs(feat, coord, cell, row_pad_to=tm)

    ref_m = ref_query_matched(x_all[:, :B * Q], params, Dact).reshape(B, Q, Od)
    err_m = float(jnp.max(jnp.abs(out - ref_m)))
    assert err_m < 1e-2, f"mismatch vs bf16-matched reference: {err_m}"

    ref_f = ref_query_f32(feat, coord, cell, params).reshape(B, Q, Od)
    err_f = float(jnp.max(jnp.abs(out - ref_f)))
    assert err_f < 5e-2, f"mismatch vs f32 reference: {err_f}"

    print("KERNEL_OK")
</pallas_src>

<mosaic_0001>
module attributes {stable_mosaic.version = 11 : i64} {
  func.func @matmul_bias_kernel(%arg0: i32, %arg1: memref<512x32xbf16, #tpu.memory_space<vmem>>, %arg2: memref<32x8xbf16, #tpu.memory_space<vmem>>, %arg3: memref<1x8xf32, #tpu.memory_space<vmem>>, %arg4: memref<512x8xf32, #tpu.memory_space<vmem>>) attributes {dimension_semantics = [#tpu.dimension_semantics<parallel>], iteration_bounds = array<i64: 1>, scalar_prefetch = 0 : i64, scratch_operands = 0 : i64, tpu.core_type = #tpu.core_type<tc>, window_params = [{transform_indices = @transform_0, window_bounds = array<i64: 512, 32>}, {pipeline_mode = #tpu.pipeline_mode<synchronous>, transform_indices = @transform_1, window_bounds = array<i64: 32, 8>}, {pipeline_mode = #tpu.pipeline_mode<synchronous>, transform_indices = @transform_2, window_bounds = array<i64: 1, 8>}, {transform_indices = @transform_3, window_bounds = array<i64: 512, 8>}]} {
    %c0 = arith.constant 0 : index
    %c0_0 = arith.constant 0 : index
    %0 = vector.load %arg1[%c0, %c0_0] : memref<512x32xbf16, #tpu.memory_space<vmem>>, vector<512x32xbf16>
    %c0_1 = arith.constant 0 : index
    %c0_2 = arith.constant 0 : index
    %1 = vector.load %arg2[%c0_1, %c0_2] : memref<32x8xbf16, #tpu.memory_space<vmem>>, vector<32x8xbf16>
    %cst = arith.constant dense<0.000000e+00> : vector<512x8xf32>
    %2 = tpu.matmul %0, %1, %cst {dimension_numbers = #tpu.dot_dimension_numbers<[1], [0], [0], [1], [0, 0, 1, 1], [], []>} : vector<512x32xbf16>, vector<32x8xbf16>, vector<512x8xf32> -> vector<512x8xf32>
    %c0_3 = arith.constant 0 : index
    %c0_4 = arith.constant 0 : index
    %3 = vector.load %arg3[%c0_3, %c0_4] : memref<1x8xf32, #tpu.memory_space<vmem>>, vector<1x8xf32>
    %4 = vector.broadcast %3 : vector<1x8xf32> to vector<512x8xf32>
    %5 = arith.addf %2, %4 : vector<512x8xf32>
    %c0_5 = arith.constant 0 : index
    %c0_6 = arith.constant 0 : index
    %6 = vector.load %arg4[%c0_5, %c0_6] : memref<512x8xf32, #tpu.memory_space<vmem>>, vector<512x8xf32>
    tpu.vector_store %arg4[%c0_5, %c0_6], %5 {strides = array<i32>} : memref<512x8xf32, #tpu.memory_space<vmem>>, vector<512x8xf32>,
    return
  }
  func.func @transform_0(%arg0: i32) -> (i32, i32) {
    %c0_i32 = arith.constant 0 : i32
    %c0_i32_0 = arith.constant 0 : i32
    return %arg0, %c0_i32 : i32, i32
  }
  func.func @transform_1(%arg0: i32) -> (i32, i32) {
    %c0_i32 = arith.constant 0 : i32
    %c0_i32_0 = arith.constant 0 : i32
    %c0_i32_1 = arith.constant 0 : i32
    return %c0_i32, %c0_i32_0 : i32, i32
  }
  func.func @transform_2(%arg0: i32) -> (i32, i32) {
    %c0_i32 = arith.constant 0 : i32
    %c0_i32_0 = arith.constant 0 : i32
    %c0_i32_1 = arith.constant 0 : i32
    return %c0_i32, %c0_i32_0 : i32, i32
  }
  func.func @transform_3(%arg0: i32) -> (i32, i32) {
    %c0_i32 = arith.constant 0 : i32
    %c0_i32_0 = arith.constant 0 : i32
    return %arg0, %c0_i32 : i32, i32
  }
}

</mosaic_0001>

<llo_original>
// kernel: tpu_custom_call.1
$region0: #{tpu_custom_call.1}
  #allocation0 [shape = 'u32[]', space=smem, size = 0x4, offset = 0x4, fixed_abs, tag = 'smem constant byte address 0x4 - core index']
  #allocation1 [shape = 'u32[144,128]{1,0:T(1,128)}', space=vmem, size = 0x12000, scoped, tag = 'internal scratch']
  %s0 = inlined_call_operand.vmem [shape: bf16[512,32], index: 0, kind: input, shape index: {}]
  %s1 = inlined_call_operand.vmem [shape: bf16[32,8], index: 1, kind: input, shape index: {}]
  %s2 = inlined_call_operand.vmem [shape: f32[1,8], index: 2, kind: input, shape index: {}]
  %s3 = inlined_call_operand.vmem [shape: f32[512,8], index: 3, kind: output, shape index: {}]
  %s4 = sld [smem:[#allocation0]]
  $region22: #{tpu_custom_call.1} parent=0
    _
  %s6 = ssub.s32 1, %s4
  %s7 = scalar_select 0, %s6, %s4
  // Predicated region
  $region2: #{tpu_custom_call.1} parent=0 // pred_check
    _
  $region3: #{tpu_custom_call.1} parent=0 // pred_check_branch
    %9 = sbr.rel (0) target = $region5
  $region4: #{tpu_custom_call.1} parent=0 // pred_region
    _
  $region5: #{tpu_custom_call.1} parent=0 // pred_fallthru
    _
  // Predicated region
  $region6: #{tpu_custom_call.1} parent=0 // pred_check
    _
  $region7: #{tpu_custom_call.1} parent=0 // pred_check_branch
    %11 = sbr.rel (0) target = $region9
  $region8: #{tpu_custom_call.1} parent=0 // pred_region
    _
  $region9: #{tpu_custom_call.1} parent=0 // pred_fallthru
    _
  // Predicated region
  $region10: #{tpu_custom_call.1} parent=0 // pred_check
    _
  $region11: #{tpu_custom_call.1} parent=0 // pred_check_branch
    %13 = sbr.rel (0) target = $region13
  $region12: #{tpu_custom_call.1} parent=0 // pred_region
    _
  $region13: #{tpu_custom_call.1} parent=0 // pred_fallthru
    _
  %v15 = vld [vmem:[%s0] sm:$0xf]
  %v16 = vld [vmem:[%s0 + $0x4] sm:$0xf]
  %v17 = vld [vmem:[%s0 + $0x8] sm:$0xf]
  %v18 = vld [vmem:[%s0 + $0xc] sm:$0xf]
  %v19 = vld [vmem:[%s0 + $0x10] sm:$0xf]
  %v20 = vld [vmem:[%s0 + $0x14] sm:$0xf]
  %v21 = vld [vmem:[%s0 + $0x18] sm:$0xf]
  %v22 = vld [vmem:[%s0 + $0x1c] sm:$0xf]
  %v23 = vld [vmem:[%s0 + $0x20] sm:$0xf]
  %v24 = vld [vmem:[%s0 + $0x24] sm:$0xf]
  %v25 = vld [vmem:[%s0 + $0x28] sm:$0xf]
  %v26 = vld [vmem:[%s0 + $0x2c] sm:$0xf]
  %v27 = vld [vmem:[%s0 + $0x30] sm:$0xf]
  %v28 = vld [vmem:[%s0 + $0x34] sm:$0xf]
  %v29 = vld [vmem:[%s0 + $0x38] sm:$0xf]
  %v30 = vld [vmem:[%s0 + $0x3c] sm:$0xf]
  %v31 = vld [vmem:[%s0 + $0x40] sm:$0xf]
  %v32 = vld [vmem:[%s0 + $0x44] sm:$0xf]
  %v33 = vld [vmem:[%s0 + $0x48] sm:$0xf]
  %v34 = vld [vmem:[%s0 + $0x4c] sm:$0xf]
  %v35 = vld [vmem:[%s0 + $0x50] sm:$0xf]
  %v36 = vld [vmem:[%s0 + $0x54] sm:$0xf]
  %v37 = vld [vmem:[%s0 + $0x58] sm:$0xf]
  %v38 = vld [vmem:[%s0 + $0x5c] sm:$0xf]
  %v39 = vld [vmem:[%s0 + $0x60] sm:$0xf]
  %v40 = vld [vmem:[%s0 + $0x64] sm:$0xf]
  %v41 = vld [vmem:[%s0 + $0x68] sm:$0xf]
  %v42 = vld [vmem:[%s0 + $0x6c] sm:$0xf]
  %v43 = vld [vmem:[%s0 + $0x70] sm:$0xf]
  %v44 = vld [vmem:[%s0 + $0x74] sm:$0xf]
  %v45 = vld [vmem:[%s0 + $0x78] sm:$0xf]
  %v46 = vld [vmem:[%s0 + $0x7c] sm:$0xf]
  %v47 = vld [vmem:[%s0 + $0x80] sm:$0xf]
  %v48 = vld [vmem:[%s0 + $0x84] sm:$0xf]
  %v49 = vld [vmem:[%s0 + $0x88] sm:$0xf]
  %v50 = vld [vmem:[%s0 + $0x8c] sm:$0xf]
  %v51 = vld [vmem:[%s0 + $0x90] sm:$0xf]
  %v52 = vld [vmem:[%s0 + $0x94] sm:$0xf]
  %v53 = vld [vmem:[%s0 + $0x98] sm:$0xf]
  %v54 = vld [vmem:[%s0 + $0x9c] sm:$0xf]
  %v55 = vld [vmem:[%s0 + $0xa0] sm:$0xf]
  %v56 = vld [vmem:[%s0 + $0xa4] sm:$0xf]
  %v57 = vld [vmem:[%s0 + $0xa8] sm:$0xf]
  %v58 = vld [vmem:[%s0 + $0xac] sm:$0xf]
  %v59 = vld [vmem:[%s0 + $0xb0] sm:$0xf]
  %v60 = vld [vmem:[%s0 + $0xb4] sm:$0xf]
  %v61 = vld [vmem:[%s0 + $0xb8] sm:$0xf]
  %v62 = vld [vmem:[%s0 + $0xbc] sm:$0xf]
  %v63 = vld [vmem:[%s0 + $0xc0] sm:$0xf]
  %v64 = vld [vmem:[%s0 + $0xc4] sm:$0xf]
  %v65 = vld [vmem:[%s0 + $0xc8] sm:$0xf]
  %v66 = vld [vmem:[%s0 + $0xcc] sm:$0xf]
  %v67 = vld [vmem:[%s0 + $0xd0] sm:$0xf]
  %v68 = vld [vmem:[%s0 + $0xd4] sm:$0xf]
  %v69 = vld [vmem:[%s0 + $0xd8] sm:$0xf]
  %v70 = vld [vmem:[%s0 + $0xdc] sm:$0xf]
  %v71 = vld [vmem:[%s0 + $0xe0] sm:$0xf]
  %v72 = vld [vmem:[%s0 + $0xe4] sm:$0xf]
  %v73 = vld [vmem:[%s0 + $0xe8] sm:$0xf]
  %v74 = vld [vmem:[%s0 + $0xec] sm:$0xf]
  %v75 = vld [vmem:[%s0 + $0xf0] sm:$0xf]
  %v76 = vld [vmem:[%s0 + $0xf4] sm:$0xf]
  %v77 = vld [vmem:[%s0 + $0xf8] sm:$0xf]
  %v78 = vld [vmem:[%s0 + $0xfc] sm:$0xf]
  %v79 = vld [vmem:[%s1] sm:$0xf]
  %v80 = vld [vmem:[%s1 + $0x4] sm:$0xf]
  %v81 = vld [vmem:[%s1 + $0x8] sm:$0xf]
  %v82 = vld [vmem:[%s1 + $0xc] sm:$0xf]
  %v83 = vld [vmem:[%s2] sm:$0x1]
  %v85 = vlaneseq
  %v86 = vshrl.u32 %v85, 7
  %v87 = vsub.s32 0, %v86
  %v88 = vrot.slane %v83, %v87
  %v154 = vunpack.c.l.b16 %v15
  %v155 = vunpack.c.l.b16 %v16
  %v156 = vunpack.c.l.b16 %v17
  %v157 = vunpack.c.l.b16 %v18
  %v158 = vunpack.c.l.b16 %v19
  %v159 = vunpack.c.l.b16 %v20
  %v160 = vunpack.c.l.b16 %v21
  %v161 = vunpack.c.l.b16 %v22
  %v162 = vunpack.c.l.b16 %v23
  %v163 = vunpack.c.l.b16 %v24
  %v164 = vunpack.c.l.b16 %v25
  %v165 = vunpack.c.l.b16 %v26
  %v166 = vunpack.c.l.b16 %v27
  %v167 = vunpack.c.l.b16 %v28
  %v168 = vunpack.c.l.b16 %v29
  %v169 = vunpack.c.l.b16 %v30
  %v170 = vunpack.c.l.b16 %v31
  %v171 = vunpack.c.l.b16 %v32
  %v172 = vunpack.c.l.b16 %v33
  %v173 = vunpack.c.l.b16 %v34
  %v174 = vunpack.c.l.b16 %v35
  %v175 = vunpack.c.l.b16 %v36
  %v176 = vunpack.c.l.b16 %v37
  %v177 = vunpack.c.l.b16 %v38
  %v178 = vunpack.c.l.b16 %v39
  %v179 = vunpack.c.l.b16 %v40
  %v180 = vunpack.c.l.b16 %v41
  %v181 = vunpack.c.l.b16 %v42
  %v182 = vunpack.c.l.b16 %v43
  %v183 = vunpack.c.l.b16 %v44
  %v184 = vunpack.c.l.b16 %v45
  %v185 = vunpack.c.l.b16 %v46
  %v186 = vunpack.c.l.b16 %v47
  %v187 = vunpack.c.l.b16 %v48
  %v188 = vunpack.c.l.b16 %v49
  %v189 = vunpack.c.l.b16 %v50
  %v190 = vunpack.c.l.b16 %v51
  %v191 = vunpack.c.l.b16 %v52
  %v192 = vunpack.c.l.b16 %v53
  %v193 = vunpack.c.l.b16 %v54
  %v194 = vunpack.c.l.b16 %v55
  %v195 = vunpack.c.l.b16 %v56
  %v196 = vunpack.c.l.b16 %v57
  %v197 = vunpack.c.l.b16 %v58
  %v198 = vunpack.c.l.b16 %v59
  %v199 = vunpack.c.l.b16 %v60
  %v200 = vunpack.c.l.b16 %v61
  %v201 = vunpack.c.l.b16 %v62
  %v202 = vunpack.c.l.b16 %v63
  %v203 = vunpack.c.l.b16 %v64
  %v204 = vunpack.c.l.b16 %v65
  %v205 = vunpack.c.l.b16 %v66
  %v206 = vunpack.c.l.b16 %v67
  %v207 = vunpack.c.l.b16 %v68
  %v208 = vunpack.c.l.b16 %v69
  %v209 = vunpack.c.l.b16 %v70
  %v210 = vunpack.c.l.b16 %v71
  %v211 = vunpack.c.l.b16 %v72
  %v212 = vunpack.c.l.b16 %v73
  %v213 = vunpack.c.l.b16 %v74
  %v214 = vunpack.c.l.b16 %v75
  %v215 = vunpack.c.l.b16 %v76
  %v216 = vunpack.c.l.b16 %v77
  %v217 = vunpack.c.l.b16 %v78
  %v218 = vpack.c.b16 %v155, %v154
  %v219 = vpack.c.b16 %v157, %v156
  %v220 = vpack.c.b16 %v159, %v158
  %v221 = vpack.c.b16 %v161, %v160
  %v222 = vpack.c.b16 %v163, %v162
  %v223 = vpack.c.b16 %v165, %v164
  %v224 = vpack.c.b16 %v167, %v166
  %v225 = vpack.c.b16 %v169, %v168
  %v226 = vpack.c.b16 %v171, %v170
  %v227 = vpack.c.b16 %v173, %v172
  %v228 = vpack.c.b16 %v175, %v174
  %v229 = vpack.c.b16 %v177, %v176
  %v230 = vpack.c.b16 %v179, %v178
  %v231 = vpack.c.b16 %v181, %v180
  %v232 = vpack.c.b16 %v183, %v182
  %v233 = vpack.c.b16 %v185, %v184
  %v234 = vpack.c.b16 %v187, %v186
  %v235 = vpack.c.b16 %v189, %v188
  %v236 = vpack.c.b16 %v191, %v190
  %v237 = vpack.c.b16 %v193, %v192
  %v238 = vpack.c.b16 %v195, %v194
  %v239 = vpack.c.b16 %v197, %v196
  %v240 = vpack.c.b16 %v199, %v198
  %v241 = vpack.c.b16 %v201, %v200
  %v242 = vpack.c.b16 %v203, %v202
  %v243 = vpack.c.b16 %v205, %v204
  %v244 = vpack.c.b16 %v207, %v206
  %v245 = vpack.c.b16 %v209, %v208
  %v246 = vpack.c.b16 %v211, %v210
  %v247 = vpack.c.b16 %v213, %v212
  %v248 = vpack.c.b16 %v215, %v214
  %v249 = vpack.c.b16 %v217, %v216
  %v254 = vunpack.c.l.b16 %v79
  %v255 = vunpack.c.l.b16 %v80
  %v256 = vunpack.c.l.b16 %v81
  %v257 = vunpack.c.l.b16 %v82
  %v258 = vpack.c.b16 %v255, %v254
  %v259 = vpack.c.b16 %v257, %v256
  %vm262 = vcmask 261120
  %v264 = vsel %vm262, %v218, 0
  %v267 = vsel %vm262, %v219, 0
  %v270 = vsel %vm262, %v220, 0
  %v273 = vsel %vm262, %v221, 0
  %v276 = vsel %vm262, %v222, 0
  %v279 = vsel %vm262, %v223, 0
  %v282 = vsel %vm262, %v224, 0
  %v285 = vsel %vm262, %v225, 0
  %v288 = vsel %vm262, %v226, 0
  %v291 = vsel %vm262, %v227, 0
  %v294 = vsel %vm262, %v228, 0
  %v297 = vsel %vm262, %v229, 0
  %v300 = vsel %vm262, %v230, 0
  %v303 = vsel %vm262, %v231, 0
  %v306 = vsel %vm262, %v232, 0
  %v309 = vsel %vm262, %v233, 0
  %v312 = vsel %vm262, %v234, 0
  %v315 = vsel %vm262, %v235, 0
  %v318 = vsel %vm262, %v236, 0
  %v321 = vsel %vm262, %v237, 0
  %v324 = vsel %vm262, %v238, 0
  %v327 = vsel %vm262, %v239, 0
  %v330 = vsel %vm262, %v240, 0
  %v333 = vsel %vm262, %v241, 0
  %v336 = vsel %vm262, %v242, 0
  %v339 = vsel %vm262, %v243, 0
  %v342 = vsel %vm262, %v244, 0
  %v345 = vsel %vm262, %v245, 0
  %v348 = vsel %vm262, %v246, 0
  %v351 = vsel %vm262, %v247, 0
  %v354 = vsel %vm262, %v248, 0
  %v357 = vsel %vm262, %v249, 0
  %359 = vmatprep.subr.bf16.mxu0 0
  %360 = vmatpush1.bf16.msra.mxu0 0
  %361 = vmatprep.subr.bf16.mxu0 0
  %362 = vmatpush1.bf16.msra.mxu0 0
  %363 = vmatprep.subr.bf16.mxu0 0
  %364 = vmatpush1.bf16.msra.mxu0 0
  %365 = vmatprep.subr.bf16.mxu0 0
  %366 = vmatpush1.bf16.msra.mxu0 0
  %367 = vmatprep.subr.bf16.mxu0 0
  %368 = vmatpush1.bf16.msra.mxu0 0
  %369 = vmatprep.subr.bf16.mxu0 0
  %370 = vmatpush1.bf16.msra.mxu0 0
  %371 = vmatprep.subr.bf16.mxu0 0
  %372 = vmatpush1.bf16.msra.mxu0 %v259
  %373 = vmatprep.subr.bf16.mxu0 0
  %374 = vmatpush1.bf16.msra.mxu0 %v258
  %375 = vmatprep.subr.bf16.mxu0 0
  %376 = vmatpush2.bf16.msra.mxu0 0
  %377 = vmatprep.subr.bf16.mxu0 0
  %378 = vmatpush2.bf16.msra.mxu0 0
  %379 = vmatprep.subr.bf16.mxu0 0
  %380 = vmatpush2.bf16.msra.mxu0 0
  %381 = vmatprep.subr.bf16.mxu0 0
  %382 = vmatpush2.bf16.msra.mxu0 0
  %383 = vmatprep.subr.bf16.mxu0 0
  %384 = vmatpush2.bf16.msra.mxu0 0
  %385 = vmatprep.subr.bf16.mxu0 0
  %386 = vmatpush2.bf16.msra.mxu0 0
  %387 = vmatprep.subr.bf16.mxu0 0
  %388 = vmatpush2.bf16.msra.mxu0 0
  %389 = vmatprep.subr.bf16.mxu0 0
  %390 = vmatpush2.bf16.msra.mxu0 0
  %391 = vmatprep.mubr.bf16.mxu0 0
  %392 = vmatmul.mubr.bf16.gmra.mxu0 %v264
  %v393 = vpop.f32.mrf.mxu0
  %v394 = vadd.f32 %v88, %v393
  %v395 = vpop.f32.mrf.mxu0
  %v396 = vpop.f32.mrf.mxu0
  %v397 = vadd.f32 %v88, %v396
  %v398 = vpop.f32.mrf.mxu0
  %399 = vmatprep.mubr.bf16.mxu0 0
  %400 = vmatmul.mubr.bf16.gmra.mxu0 %v267
  %v401 = vpop.f32.mrf.mxu0
  %v402 = vadd.f32 %v88, %v401
  %v403 = vpop.f32.mrf.mxu0
  %v404 = vpop.f32.mrf.mxu0
  %v405 = vadd.f32 %v88, %v404
  %v406 = vpop.f32.mrf.mxu0
  %407 = vmatprep.mubr.bf16.mxu0 0
  %408 = vmatmul.mubr.bf16.gmra.mxu0 %v270
  %v409 = vpop.f32.mrf.mxu0
  %v410 = vadd.f32 %v88, %v409
  %v411 = vpop.f32.mrf.mxu0
  %v412 = vpop.f32.mrf.mxu0
  %v413 = vadd.f32 %v88, %v412
  %v414 = vpop.f32.mrf.mxu0
  %415 = vmatprep.mubr.bf16.mxu0 0
  %416 = vmatmul.mubr.bf16.gmra.mxu0 %v273
  %v417 = vpop.f32.mrf.mxu0
  %v418 = vadd.f32 %v88, %v417
  %v419 = vpop.f32.mrf.mxu0
  %v420 = vpop.f32.mrf.mxu0
  %v421 = vadd.f32 %v88, %v420
  %v422 = vpop.f32.mrf.mxu0
  %423 = vmatprep.mubr.bf16.mxu0 0
  %424 = vmatmul.mubr.bf16.gmra.mxu0 %v276
  %v425 = vpop.f32.mrf.mxu0
  %v426 = vadd.f32 %v88, %v425
  %v427 = vpop.f32.mrf.mxu0
  %v428 = vpop.f32.mrf.mxu0
  %v429 = vadd.f32 %v88, %v428
  %v430 = vpop.f32.mrf.mxu0
  %431 = vmatprep.mubr.bf16.mxu0 0
  %432 = vmatmul.mubr.bf16.gmra.mxu0 %v279
  %v433 = vpop.f32.mrf.mxu0
  %v434 = vadd.f32 %v88, %v433
  %v435 = vpop.f32.mrf.mxu0
  %v436 = vpop.f32.mrf.mxu0
  %v437 = vadd.f32 %v88, %v436
  %v438 = vpop.f32.mrf.mxu0
  %439 = vmatprep.mubr.bf16.mxu0 0
  %440 = vmatmul.mubr.bf16.gmra.mxu0 %v282
  %v441 = vpop.f32.mrf.mxu0
  %v442 = vadd.f32 %v88, %v441
  %v443 = vpop.f32.mrf.mxu0
  %v444 = vpop.f32.mrf.mxu0
  %v445 = vadd.f32 %v88, %v444
  %v446 = vpop.f32.mrf.mxu0
  %447 = vmatprep.mubr.bf16.mxu0 0
  %448 = vmatmul.mubr.bf16.gmra.mxu0 %v285
  %v449 = vpop.f32.mrf.mxu0
  %v450 = vadd.f32 %v88, %v449
  %v451 = vpop.f32.mrf.mxu0
  %v452 = vpop.f32.mrf.mxu0
  %v453 = vadd.f32 %v88, %v452
  %v454 = vpop.f32.mrf.mxu0
  %455 = vmatprep.mubr.bf16.mxu0 0
  %456 = vmatmul.mubr.bf16.gmra.mxu0 %v288
  %v457 = vpop.f32.mrf.mxu0
  %v458 = vadd.f32 %v88, %v457
  %v459 = vpop.f32.mrf.mxu0
  %v460 = vpop.f32.mrf.mxu0
  %v461 = vadd.f32 %v88, %v460
  %v462 = vpop.f32.mrf.mxu0
  %463 = vmatprep.mubr.bf16.mxu0 0
  %464 = vmatmul.mubr.bf16.gmra.mxu0 %v291
  %v465 = vpop.f32.mrf.mxu0
  %v466 = vadd.f32 %v88, %v465
  %v467 = vpop.f32.mrf.mxu0
  %v468 = vpop.f32.mrf.mxu0
  %v469 = vadd.f32 %v88, %v468
  %v470 = vpop.f32.mrf.mxu0
  %471 = vmatprep.mubr.bf16.mxu0 0
  %472 = vmatmul.mubr.bf16.gmra.mxu0 %v294
  %v473 = vpop.f32.mrf.mxu0
  %v474 = vadd.f32 %v88, %v473
  %v475 = vpop.f32.mrf.mxu0
  %v476 = vpop.f32.mrf.mxu0
  %v477 = vadd.f32 %v88, %v476
  %v478 = vpop.f32.mrf.mxu0
  %479 = vmatprep.mubr.bf16.mxu0 0
  %480 = vmatmul.mubr.bf16.gmra.mxu0 %v297
  %v481 = vpop.f32.mrf.mxu0
  %v482 = vadd.f32 %v88, %v481
  %v483 = vpop.f32.mrf.mxu0
  %v484 = vpop.f32.mrf.mxu0
  %v485 = vadd.f32 %v88, %v484
  %v486 = vpop.f32.mrf.mxu0
  %487 = vmatprep.mubr.bf16.mxu0 0
  %488 = vmatmul.mubr.bf16.gmra.mxu0 %v300
  %v489 = vpop.f32.mrf.mxu0
  %v490 = vadd.f32 %v88, %v489
  %v491 = vpop.f32.mrf.mxu0
  %v492 = vpop.f32.mrf.mxu0
  %v493 = vadd.f32 %v88, %v492
  %v494 = vpop.f32.mrf.mxu0
  %495 = vmatprep.mubr.bf16.mxu0 0
  %496 = vmatmul.mubr.bf16.gmra.mxu0 %v303
  %v497 = vpop.f32.mrf.mxu0
  %v498 = vadd.f32 %v88, %v497
  %v499 = vpop.f32.mrf.mxu0
  %v500 = vpop.f32.mrf.mxu0
  %v501 = vadd.f32 %v88, %v500
  %v502 = vpop.f32.mrf.mxu0
  %503 = vmatprep.mubr.bf16.mxu0 0
  %504 = vmatmul.mubr.bf16.gmra.mxu0 %v306
  %v505 = vpop.f32.mrf.mxu0
  %v506 = vadd.f32 %v88, %v505
  %v507 = vpop.f32.mrf.mxu0
  %v508 = vpop.f32.mrf.mxu0
  %v509 = vadd.f32 %v88, %v508
  %v510 = vpop.f32.mrf.mxu0
  %511 = vmatprep.mubr.bf16.mxu0 0
  %512 = vmatmul.mubr.bf16.gmra.mxu0 %v309
  %v513 = vpop.f32.mrf.mxu0
  %v514 = vadd.f32 %v88, %v513
  %v515 = vpop.f32.mrf.mxu0
  %v516 = vpop.f32.mrf.mxu0
  %v517 = vadd.f32 %v88, %v516
  %v518 = vpop.f32.mrf.mxu0
  %519 = vmatprep.mubr.bf16.mxu0 0
  %520 = vmatmul.mubr.bf16.gmra.mxu0 %v312
  %v521 = vpop.f32.mrf.mxu0
  %v522 = vadd.f32 %v88, %v521
  %v523 = vpop.f32.mrf.mxu0
  %v524 = vpop.f32.mrf.mxu0
  %v525 = vadd.f32 %v88, %v524
  %v526 = vpop.f32.mrf.mxu0
  %527 = vmatprep.mubr.bf16.mxu0 0
  %528 = vmatmul.mubr.bf16.gmra.mxu0 %v315
  %v529 = vpop.f32.mrf.mxu0
  %v530 = vadd.f32 %v88, %v529
  %v531 = vpop.f32.mrf.mxu0
  %v532 = vpop.f32.mrf.mxu0
  %v533 = vadd.f32 %v88, %v532
  %v534 = vpop.f32.mrf.mxu0
  %535 = vmatprep.mubr.bf16.mxu0 0
  %536 = vmatmul.mubr.bf16.gmra.mxu0 %v318
  %v537 = vpop.f32.mrf.mxu0
  %v538 = vadd.f32 %v88, %v537
  %v539 = vpop.f32.mrf.mxu0
  %v540 = vpop.f32.mrf.mxu0
  %v541 = vadd.f32 %v88, %v540
  %v542 = vpop.f32.mrf.mxu0
  %543 = vmatprep.mubr.bf16.mxu0 0
  %544 = vmatmul.mubr.bf16.gmra.mxu0 %v321
  %v545 = vpop.f32.mrf.mxu0
  %v546 = vadd.f32 %v88, %v545
  %v547 = vpop.f32.mrf.mxu0
  %v548 = vpop.f32.mrf.mxu0
  %v549 = vadd.f32 %v88, %v548
  %v550 = vpop.f32.mrf.mxu0
  %551 = vmatprep.mubr.bf16.mxu0 0
  %552 = vmatmul.mubr.bf16.gmra.mxu0 %v324
  %v553 = vpop.f32.mrf.mxu0
  %v554 = vadd.f32 %v88, %v553
  %v555 = vpop.f32.mrf.mxu0
  %v556 = vpop.f32.mrf.mxu0
  %v557 = vadd.f32 %v88, %v556
  %v558 = vpop.f32.mrf.mxu0
  %559 = vmatprep.mubr.bf16.mxu0 0
  %560 = vmatmul.mubr.bf16.gmra.mxu0 %v327
  %v561 = vpop.f32.mrf.mxu0
  %v562 = vadd.f32 %v88, %v561
  %v563 = vpop.f32.mrf.mxu0
  %v564 = vpop.f32.mrf.mxu0
  %v565 = vadd.f32 %v88, %v564
  %v566 = vpop.f32.mrf.mxu0
  %567 = vmatprep.mubr.bf16.mxu0 0
  %568 = vmatmul.mubr.bf16.gmra.mxu0 %v330
  %v569 = vpop.f32.mrf.mxu0
  %v570 = vadd.f32 %v88, %v569
  %v571 = vpop.f32.mrf.mxu0
  %v572 = vpop.f32.mrf.mxu0
  %v573 = vadd.f32 %v88, %v572
  %v574 = vpop.f32.mrf.mxu0
  %575 = vmatprep.mubr.bf16.mxu0 0
  %576 = vmatmul.mubr.bf16.gmra.mxu0 %v333
  %v577 = vpop.f32.mrf.mxu0
  %v578 = vadd.f32 %v88, %v577
  %v579 = vpop.f32.mrf.mxu0
  %v580 = vpop.f32.mrf.mxu0
  %v581 = vadd.f32 %v88, %v580
  %v582 = vpop.f32.mrf.mxu0
  %583 = vmatprep.mubr.bf16.mxu0 0
  %584 = vmatmul.mubr.bf16.gmra.mxu0 %v336
  %v585 = vpop.f32.mrf.mxu0
  %v586 = vadd.f32 %v88, %v585
  %v587 = vpop.f32.mrf.mxu0
  %v588 = vpop.f32.mrf.mxu0
  %v589 = vadd.f32 %v88, %v588
  %v590 = vpop.f32.mrf.mxu0
  %591 = vmatprep.mubr.bf16.mxu0 0
  %592 = vmatmul.mubr.bf16.gmra.mxu0 %v339
  %v593 = vpop.f32.mrf.mxu0
  %v594 = vadd.f32 %v88, %v593
  %v595 = vpop.f32.mrf.mxu0
  %v596 = vpop.f32.mrf.mxu0
  %v597 = vadd.f32 %v88, %v596
  %v598 = vpop.f32.mrf.mxu0
  %599 = vmatprep.mubr.bf16.mxu0 0
  %600 = vmatmul.mubr.bf16.gmra.mxu0 %v342
  %v601 = vpop.f32.mrf.mxu0
  %v602 = vadd.f32 %v88, %v601
  %v603 = vpop.f32.mrf.mxu0
  %v604 = vpop.f32.mrf.mxu0
  %v605 = vadd.f32 %v88, %v604
  %v606 = vpop.f32.mrf.mxu0
  %607 = vmatprep.mubr.bf16.mxu0 0
  %608 = vmatmul.mubr.bf16.gmra.mxu0 %v345
  %v609 = vpop.f32.mrf.mxu0
  %v610 = vadd.f32 %v88, %v609
  %v611 = vpop.f32.mrf.mxu0
  %v612 = vpop.f32.mrf.mxu0
  %v613 = vadd.f32 %v88, %v612
  %v614 = vpop.f32.mrf.mxu0
  %615 = vmatprep.mubr.bf16.mxu0 0
  %616 = vmatmul.mubr.bf16.gmra.mxu0 %v348
  %v617 = vpop.f32.mrf.mxu0
  %v618 = vadd.f32 %v88, %v617
  %v619 = vpop.f32.mrf.mxu0
  %v620 = vpop.f32.mrf.mxu0
  %v621 = vadd.f32 %v88, %v620
  %v622 = vpop.f32.mrf.mxu0
  %623 = vmatprep.mubr.bf16.mxu0 0
  %624 = vmatmul.mubr.bf16.gmra.mxu0 %v351
  %v625 = vpop.f32.mrf.mxu0
  %v626 = vadd.f32 %v88, %v625
  %v627 = vpop.f32.mrf.mxu0
  %v628 = vpop.f32.mrf.mxu0
  %v629 = vadd.f32 %v88, %v628
  %v630 = vpop.f32.mrf.mxu0
  %631 = vmatprep.mubr.bf16.mxu0 0
  %632 = vmatmul.mubr.bf16.gmra.mxu0 %v354
  %v633 = vpop.f32.mrf.mxu0
  %v634 = vadd.f32 %v88, %v633
  %v635 = vpop.f32.mrf.mxu0
  %v636 = vpop.f32.mrf.mxu0
  %v637 = vadd.f32 %v88, %v636
  %v638 = vpop.f32.mrf.mxu0
  %639 = vmatprep.mubr.bf16.mxu0 0
  %640 = vmatmul.mubr.bf16.gmra.mxu0 %v357
  %v641 = vpop.f32.mrf.mxu0
  %v642 = vadd.f32 %v88, %v641
  %v643 = vpop.f32.mrf.mxu0
  %v644 = vpop.f32.mrf.mxu0
  %v645 = vadd.f32 %v88, %v644
  %v646 = vpop.f32.mrf.mxu0
  %647 = vdwg.mxu0
  %vm648 = vcmask 64512
  %649 = vst.msk [vmem:[%s3] sm:$0xff] %vm648, %v394
  %650 = vst.msk [vmem:[%s3 + $0x8] sm:$0xff] %vm648, %v397
  %651 = vst.msk [vmem:[%s3 + $0x10] sm:$0xff] %vm648, %v402
  %652 = vst.msk [vmem:[%s3 + $0x18] sm:$0xff] %vm648, %v405
  %653 = vst.msk [vmem:[%s3 + $0x20] sm:$0xff] %vm648, %v410
  %654 = vst.msk [vmem:[%s3 + $0x28] sm:$0xff] %vm648, %v413
  %655 = vst.msk [vmem:[%s3 + $0x30] sm:$0xff] %vm648, %v418
  %656 = vst.msk [vmem:[%s3 + $0x38] sm:$0xff] %vm648, %v421
  %657 = vst.msk [vmem:[%s3 + $0x40] sm:$0xff] %vm648, %v426
  %658 = vst.msk [vmem:[%s3 + $0x48] sm:$0xff] %vm648, %v429
  %659 = vst.msk [vmem:[%s3 + $0x50] sm:$0xff] %vm648, %v434
  %660 = vst.msk [vmem:[%s3 + $0x58] sm:$0xff] %vm648, %v437
  %661 = vst.msk [vmem:[%s3 + $0x60] sm:$0xff] %vm648, %v442
  %662 = vst.msk [vmem:[%s3 + $0x68] sm:$0xff] %vm648, %v445
  %663 = vst.msk [vmem:[%s3 + $0x70] sm:$0xff] %vm648, %v450
  %664 = vst.msk [vmem:[%s3 + $0x78] sm:$0xff] %vm648, %v453
  %665 = vst.msk [vmem:[%s3 + $0x80] sm:$0xff] %vm648, %v458
  %666 = vst.msk [vmem:[%s3 + $0x88] sm:$0xff] %vm648, %v461
  %667 = vst.msk [vmem:[%s3 + $0x90] sm:$0xff] %vm648, %v466
  %668 = vst.msk [vmem:[%s3 + $0x98] sm:$0xff] %vm648, %v469
  %669 = vst.msk [vmem:[%s3 + $0xa0] sm:$0xff] %vm648, %v474
  %670 = vst.msk [vmem:[%s3 + $0xa8] sm:$0xff] %vm648, %v477
  %671 = vst.msk [vmem:[%s3 + $0xb0] sm:$0xff] %vm648, %v482
  %672 = vst.msk [vmem:[%s3 + $0xb8] sm:$0xff] %vm648, %v485
  %673 = vst.msk [vmem:[%s3 + $0xc0] sm:$0xff] %vm648, %v490
  %674 = vst.msk [vmem:[%s3 + $0xc8] sm:$0xff] %vm648, %v493
  %675 = vst.msk [vmem:[%s3 + $0xd0] sm:$0xff] %vm648, %v498
  %676 = vst.msk [vmem:[%s3 + $0xd8] sm:$0xff] %vm648, %v501
  %677 = vst.msk [vmem:[%s3 + $0xe0] sm:$0xff] %vm648, %v506
  %678 = vst.msk [vmem:[%s3 + $0xe8] sm:$0xff] %vm648, %v509
  %679 = vst.msk [vmem:[%s3 + $0xf0] sm:$0xff] %vm648, %v514
  %680 = vst.msk [vmem:[%s3 + $0xf8] sm:$0xff] %vm648, %v517
  %681 = vst.msk [vmem:[%s3 + $0x100] sm:$0xff] %vm648, %v522
  %682 = vst.msk [vmem:[%s3 + $0x108] sm:$0xff] %vm648, %v525
  %683 = vst.msk [vmem:[%s3 + $0x110] sm:$0xff] %vm648, %v530
  %684 = vst.msk [vmem:[%s3 + $0x118] sm:$0xff] %vm648, %v533
  %685 = vst.msk [vmem:[%s3 + $0x120] sm:$0xff] %vm648, %v538
  %686 = vst.msk [vmem:[%s3 + $0x128] sm:$0xff] %vm648, %v541
  %687 = vst.msk [vmem:[%s3 + $0x130] sm:$0xff] %vm648, %v546
  %688 = vst.msk [vmem:[%s3 + $0x138] sm:$0xff] %vm648, %v549
  %689 = vst.msk [vmem:[%s3 + $0x140] sm:$0xff] %vm648, %v554
  %690 = vst.msk [vmem:[%s3 + $0x148] sm:$0xff] %vm648, %v557
  %691 = vst.msk [vmem:[%s3 + $0x150] sm:$0xff] %vm648, %v562
  %692 = vst.msk [vmem:[%s3 + $0x158] sm:$0xff] %vm648, %v565
  %693 = vst.msk [vmem:[%s3 + $0x160] sm:$0xff] %vm648, %v570
  %694 = vst.msk [vmem:[%s3 + $0x168] sm:$0xff] %vm648, %v573
  %695 = vst.msk [vmem:[%s3 + $0x170] sm:$0xff] %vm648, %v578
  %696 = vst.msk [vmem:[%s3 + $0x178] sm:$0xff] %vm648, %v581
  %697 = vst.msk [vmem:[%s3 + $0x180] sm:$0xff] %vm648, %v586
  %698 = vst.msk [vmem:[%s3 + $0x188] sm:$0xff] %vm648, %v589
  %699 = vst.msk [vmem:[%s3 + $0x190] sm:$0xff] %vm648, %v594
  %700 = vst.msk [vmem:[%s3 + $0x198] sm:$0xff] %vm648, %v597
  %701 = vst.msk [vmem:[%s3 + $0x1a0] sm:$0xff] %vm648, %v602
  %702 = vst.msk [vmem:[%s3 + $0x1a8] sm:$0xff] %vm648, %v605
  %703 = vst.msk [vmem:[%s3 + $0x1b0] sm:$0xff] %vm648, %v610
  %704 = vst.msk [vmem:[%s3 + $0x1b8] sm:$0xff] %vm648, %v613
  %705 = vst.msk [vmem:[%s3 + $0x1c0] sm:$0xff] %vm648, %v618
  %706 = vst.msk [vmem:[%s3 + $0x1c8] sm:$0xff] %vm648, %v621
  %707 = vst.msk [vmem:[%s3 + $0x1d0] sm:$0xff] %vm648, %v626
  %708 = vst.msk [vmem:[%s3 + $0x1d8] sm:$0xff] %vm648, %v629
  %709 = vst.msk [vmem:[%s3 + $0x1e0] sm:$0xff] %vm648, %v634
  %710 = vst.msk [vmem:[%s3 + $0x1e8] sm:$0xff] %vm648, %v637
  %711 = vst.msk [vmem:[%s3 + $0x1f0] sm:$0xff] %vm648, %v642
  %712 = vst.msk [vmem:[%s3 + $0x1f8] sm:$0xff] %vm648, %v645
  // Predicated region
  $region14: #{tpu_custom_call.1} parent=0 // pred_check
    _
  $region15: #{tpu_custom_call.1} parent=0 // pred_check_branch
    %714 = sbr.rel (0) target = $region17
  $region16: #{tpu_custom_call.1} parent=0 // pred_region
    _
  $region17: #{tpu_custom_call.1} parent=0 // pred_fallthru
    _
  // Predicated region
  $region18: #{tpu_custom_call.1} parent=0 // pred_check
    _
  $region19: #{tpu_custom_call.1} parent=0 // pred_check_branch
    %716 = sbr.rel (0) target = $region21
  $region20: #{tpu_custom_call.1} parent=0 // pred_region
    _
  $region21: #{tpu_custom_call.1} parent=0 // pred_fallthru
    _

</llo_original>
